<compile_context>
chip_gen: v7x
topology: tpu7x:2x2x1
jax: 0.10.0
libtpu: 0.0.40
codegen_flags: <defaults>
</compile_context>

<pallas_src>
import functools

import jax
import jax.numpy as jnp
from jax.experimental import pallas as pl
from jax.experimental.pallas import tpu as pltpu


def _basic_block_kernel(x_ref, w1_ref, s1_ref, b1_ref, w2_ref, s2_ref, b2_ref,
                        o_ref, *, H, W, Cin, Cout, matmul_dtype):
    """Fused BasicBlock forward for one batch element.

    x_ref : (1, Cin, H*W)   f32, NCHW with space flattened (lane-dense)
    w1_ref: (Cout, 9*Cin)   conv1 weights, 9 taps folded into K
    s?_ref, b?_ref: (Cout, 1) folded BN scale / bias (f32)
    w2_ref: (Cout, 9*Cout)  conv2 weights
    o_ref : (1, Cout, H*W)  output (lane-dense)
    """
    HW = H * W
    x = x_ref[0]  # (Cin, HW) f32 -- also the residual.

    # Static spatial coordinates along the flattened (lane) dimension.
    p = jax.lax.broadcasted_iota(jnp.int32, (1, HW), 1)
    if (W & (W - 1)) == 0:
        ww = p & (W - 1)          # w coordinate (power-of-two fast path)
    else:
        ww = p % W

    # Per-tap validity masks for the conv's zero padding, computed once.
    masks = []
    for dy in (-1, 0, 1):
        for dx in (-1, 0, 1):
            m = ((p + dy * W >= 0) & (p + dy * W < HW) &
                 (ww + dx >= 0) & (ww + dx < W))
            masks.append(m)

    def im2col(v):
        # v: (C, HW) f32  ->  (9*C, HW) in matmul_dtype.
        # dy/dx shifts become rotations of the flattened lane dim (XLU),
        # with out-of-bounds positions masked to zero.
        taps = []
        t = 0
        for dy in (-1, 0, 1):
            for dx in (-1, 0, 1):
                off = dy * W + dx
                shifted = v if off == 0 else pltpu.roll(
                    v, shift=(-off) % HW, axis=1)
                taps.append(jnp.where(masks[t], shifted, 0.0))
                t += 1
        return jnp.concatenate(taps, axis=0).astype(matmul_dtype)

    # ---- conv1 (single MXU matmul) + BN1 + ReLU ----
    patch1 = im2col(x)                                   # (9*Cin, HW)
    acc1 = jnp.dot(w1_ref[...], patch1,
                   preferred_element_type=jnp.float32)   # (Cout, HW)
    out1 = jnp.maximum(acc1 * s1_ref[...] + b1_ref[...], 0.0)

    # ---- conv2 (single MXU matmul) + BN2 + residual + ReLU ----
    patch2 = im2col(out1)                                # (9*Cout, HW)
    acc2 = jnp.dot(w2_ref[...], patch2,
                   preferred_element_type=jnp.float32)   # (Cout, HW)
    out2 = acc2 * s2_ref[...] + b2_ref[...]
    o_ref[0] = jnp.maximum(out2 + x, 0.0).astype(o_ref.dtype)


def basic_block_forward(x_nchw, w1, s1, b1, w2, s2, b2,
                        matmul_dtype=jnp.bfloat16):
    """x_nchw: (N, C, H, W) f32; w1/w2: (3,3,Cin,Cout) HWIO; s?,b?: (C,) folded BN.

    Returns (N, C, H, W) float32.
    """
    N, Cin, H, W = x_nchw.shape
    Cout = w1.shape[-1]
    assert Cin == Cout, "stride=1 / downsample=None requires inplanes == planes"
    HW = H * W

    # NCHW with space flattened: free reshape, no transpose / pad in XLA.
    x_flat = x_nchw.reshape(N, Cin, HW).astype(jnp.float32)

    # Fold the 9 taps into the contraction dim:
    #   w_mat[co, (ky*3 + kx)*Ci + ci] = w[ky, kx, ci, co]
    w1_mat = jnp.transpose(w1, (3, 0, 1, 2)).reshape(
        Cout, 9 * Cin).astype(matmul_dtype)
    w2_mat = jnp.transpose(w2, (3, 0, 1, 2)).reshape(
        Cout, 9 * Cout).astype(matmul_dtype)

    s1c = s1.reshape(Cout, 1).astype(jnp.float32)
    b1c = b1.reshape(Cout, 1).astype(jnp.float32)
    s2c = s2.reshape(Cout, 1).astype(jnp.float32)
    b2c = b2.reshape(Cout, 1).astype(jnp.float32)

    kernel = functools.partial(_basic_block_kernel, H=H, W=W, Cin=Cin,
                               Cout=Cout, matmul_dtype=matmul_dtype)

    w_item = jnp.dtype(matmul_dtype).itemsize
    flops = 2 * 2 * 9 * Cin * Cout * HW * N              # two 3x3 convs
    bytes_accessed = (x_flat.size * 4 + N * Cout * HW * 4 +
                      (w1_mat.size + w2_mat.size) * w_item + 4 * Cout * 4)

    out_flat = pl.pallas_call(
        kernel,
        out_shape=jax.ShapeDtypeStruct((N, Cout, HW), jnp.float32),
        grid_spec=pltpu.PrefetchScalarGridSpec(
            num_scalar_prefetch=0,
            grid=(N,),
            in_specs=[
                pl.BlockSpec((1, Cin, HW), lambda n: (n, 0, 0)),
                pl.BlockSpec((Cout, 9 * Cin), lambda n: (0, 0)),
                pl.BlockSpec((Cout, 1), lambda n: (0, 0)),
                pl.BlockSpec((Cout, 1), lambda n: (0, 0)),
                pl.BlockSpec((Cout, 9 * Cout), lambda n: (0, 0)),
                pl.BlockSpec((Cout, 1), lambda n: (0, 0)),
                pl.BlockSpec((Cout, 1), lambda n: (0, 0)),
            ],
            out_specs=pl.BlockSpec((1, Cout, HW), lambda n: (n, 0, 0)),
        ),
        compiler_params=pltpu.CompilerParams(
            dimension_semantics=("parallel",)),
        cost_estimate=pl.CostEstimate(flops=flops, transcendentals=0,
                                      bytes_accessed=bytes_accessed),
    )(x_flat, w1_mat, s1c, b1c, w2_mat, s2c, b2c)

    return out_flat.reshape(N, Cout, H, W)


def _reference_forward(x_nchw, w1, s1, b1, w2, s2, b2,
                       matmul_dtype=jnp.float32):
    """Pure-JAX reference (lax.conv). matmul_dtype mirrors the kernel's casts."""
    x = jnp.transpose(x_nchw, (0, 2, 3, 1))

    def conv(v, w):
        return jax.lax.conv_general_dilated(
            v.astype(matmul_dtype), w.astype(matmul_dtype),
            window_strides=(1, 1), padding="SAME",
            dimension_numbers=("NHWC", "HWIO", "NHWC"),
            preferred_element_type=jnp.float32)

    o = conv(x, w1) * s1 + b1
    o = jnp.maximum(o, 0.0)
    o = conv(o, w2) * s2 + b2
    o = jnp.maximum(o + x, 0.0)
    return jnp.transpose(o, (0, 3, 1, 2))


if __name__ == "__main__":
    # Small shapes consistent with BasicBlock(inplanes=8, planes=8).
    N, C, H, W = 2, 8, 16, 16
    eps = 1e-5

    key = jax.random.PRNGKey(0)
    (k_x, k_w1, k_w2, k_g1, k_b1, k_m1, k_v1,
     k_g2, k_b2, k_m2, k_v2) = jax.random.split(key, 11)

    x = jax.random.normal(k_x, (N, C, H, W), dtype=jnp.float32)

    # Conv weights in HWIO layout (3, 3, Cin, Cout).
    w1 = jax.random.normal(k_w1, (3, 3, C, C), dtype=jnp.float32) * 0.1
    w2 = jax.random.normal(k_w2, (3, 3, C, C), dtype=jnp.float32) * 0.1

    # BatchNorm parameters (inference mode), deterministically initialized.
    gamma1 = 1.0 + 0.1 * jax.random.normal(k_g1, (C,), dtype=jnp.float32)
    beta1 = 0.1 * jax.random.normal(k_b1, (C,), dtype=jnp.float32)
    mean1 = 0.1 * jax.random.normal(k_m1, (C,), dtype=jnp.float32)
    var1 = jnp.abs(jax.random.normal(k_v1, (C,), dtype=jnp.float32)) + 0.5
    gamma2 = 1.0 + 0.1 * jax.random.normal(k_g2, (C,), dtype=jnp.float32)
    beta2 = 0.1 * jax.random.normal(k_b2, (C,), dtype=jnp.float32)
    mean2 = 0.1 * jax.random.normal(k_m2, (C,), dtype=jnp.float32)
    var2 = jnp.abs(jax.random.normal(k_v2, (C,), dtype=jnp.float32)) + 0.5

    # Fold BN into per-channel scale/bias.
    s1 = gamma1 / jnp.sqrt(var1 + eps)
    b1 = beta1 - mean1 * s1
    s2 = gamma2 / jnp.sqrt(var2 + eps)
    b2 = beta2 - mean2 * s2

    # --- f32 matmul path: tight check against the f32 reference ---
    out_f32 = jax.block_until_ready(
        basic_block_forward(x, w1, s1, b1, w2, s2, b2,
                            matmul_dtype=jnp.float32))
    ref_f32 = _reference_forward(x, w1, s1, b1, w2, s2, b2,
                                 matmul_dtype=jnp.float32)
    assert out_f32.shape == (N, C, H, W)
    assert jnp.allclose(out_f32, ref_f32, atol=1e-4, rtol=1e-4), \
        f"f32 max abs err {jnp.max(jnp.abs(out_f32 - ref_f32))}"

    # --- bf16 matmul path (default / perf path on v6e & v7x) ---
    out_bf16 = jax.block_until_ready(
        basic_block_forward(x, w1, s1, b1, w2, s2, b2,
                            matmul_dtype=jnp.bfloat16))
    ref_bf16 = _reference_forward(x, w1, s1, b1, w2, s2, b2,
                                  matmul_dtype=jnp.bfloat16)
    assert out_bf16.shape == (N, C, H, W)
    assert jnp.allclose(out_bf16, ref_bf16, atol=2e-3, rtol=2e-3), \
        f"bf16 max abs err vs bf16 ref {jnp.max(jnp.abs(out_bf16 - ref_bf16))}"
    # Sanity: bf16 path stays close to exact f32 module semantics.
    assert jnp.allclose(out_bf16, ref_f32, atol=1e-1, rtol=1e-1), \
        f"bf16 max abs err vs f32 ref {jnp.max(jnp.abs(out_bf16 - ref_f32))}"

    print("KERNEL_OK")
</pallas_src>

<mosaic_0001>
module attributes {stable_mosaic.version = 11 : i64} {
  func.func @_basic_block_kernel(%arg0: i32, %arg1: memref<1x8x256xf32, #tpu.memory_space<vmem>>, %arg2: memref<8x72xf32, #tpu.memory_space<vmem>>, %arg3: memref<8x1xf32, #tpu.memory_space<vmem>>, %arg4: memref<8x1xf32, #tpu.memory_space<vmem>>, %arg5: memref<8x72xf32, #tpu.memory_space<vmem>>, %arg6: memref<8x1xf32, #tpu.memory_space<vmem>>, %arg7: memref<8x1xf32, #tpu.memory_space<vmem>>, %arg8: memref<1x8x256xf32, #tpu.memory_space<vmem>>) attributes {dimension_semantics = [#tpu.dimension_semantics<parallel>], iteration_bounds = array<i64: 2>, scalar_prefetch = 0 : i64, scratch_operands = 0 : i64, tpu.core_type = #tpu.core_type<tc>, window_params = [{transform_indices = @transform_0, window_bounds = array<i64: 1, 8, 256>}, {pipeline_mode = #tpu.pipeline_mode<synchronous>, transform_indices = @transform_1, window_bounds = array<i64: 8, 72>}, {pipeline_mode = #tpu.pipeline_mode<synchronous>, transform_indices = @transform_2, window_bounds = array<i64: 8, 1>}, {pipeline_mode = #tpu.pipeline_mode<synchronous>, transform_indices = @transform_3, window_bounds = array<i64: 8, 1>}, {pipeline_mode = #tpu.pipeline_mode<synchronous>, transform_indices = @transform_4, window_bounds = array<i64: 8, 72>}, {pipeline_mode = #tpu.pipeline_mode<synchronous>, transform_indices = @transform_5, window_bounds = array<i64: 8, 1>}, {pipeline_mode = #tpu.pipeline_mode<synchronous>, transform_indices = @transform_6, window_bounds = array<i64: 8, 1>}, {transform_indices = @transform_7, window_bounds = array<i64: 1, 8, 256>}]} {
    %c0 = arith.constant 0 : index
    %c0_0 = arith.constant 0 : index
    %c0_1 = arith.constant 0 : index
    %0 = vector.load %arg1[%c0, %c0_0, %c0_1] : memref<1x8x256xf32, #tpu.memory_space<vmem>>, vector<1x8x256xf32>
    %1 = vector.shape_cast %0 : vector<1x8x256xf32> to vector<8x256xf32>
    %2 = tpu.iota {dimensions = array<i32: 1>} : vector<1x256xi32>
    %c15_i32 = arith.constant 15 : i32
    %3 = vector.broadcast %c15_i32 : i32 to vector<1x256xi32>
    %4 = arith.andi %2, %3 : vector<1x256xi32>
    %c-16_i32 = arith.constant -16 : i32
    %5 = vector.broadcast %c-16_i32 : i32 to vector<1x256xi32>
    %6 = arith.addi %2, %5 : vector<1x256xi32>
    %c0_i32 = arith.constant 0 : i32
    %7 = vector.broadcast %c0_i32 : i32 to vector<1x256xi32>
    %8 = arith.cmpi sge, %6, %7 : vector<1x256xi32>
    %c-16_i32_2 = arith.constant -16 : i32
    %9 = vector.broadcast %c-16_i32_2 : i32 to vector<1x256xi32>
    %10 = arith.addi %2, %9 : vector<1x256xi32>
    %c256_i32 = arith.constant 256 : i32
    %11 = vector.broadcast %c256_i32 : i32 to vector<1x256xi32>
    %12 = arith.cmpi slt, %10, %11 : vector<1x256xi32>
    %13 = arith.andi %8, %12 : vector<1x256xi1>
    %c-1_i32 = arith.constant -1 : i32
    %14 = vector.broadcast %c-1_i32 : i32 to vector<1x256xi32>
    %15 = arith.addi %4, %14 : vector<1x256xi32>
    %c0_i32_3 = arith.constant 0 : i32
    %16 = vector.broadcast %c0_i32_3 : i32 to vector<1x256xi32>
    %17 = arith.cmpi sge, %15, %16 : vector<1x256xi32>
    %18 = arith.andi %13, %17 : vector<1x256xi1>
    %c-1_i32_4 = arith.constant -1 : i32
    %19 = vector.broadcast %c-1_i32_4 : i32 to vector<1x256xi32>
    %20 = arith.addi %4, %19 : vector<1x256xi32>
    %c16_i32 = arith.constant 16 : i32
    %21 = vector.broadcast %c16_i32 : i32 to vector<1x256xi32>
    %22 = arith.cmpi slt, %20, %21 : vector<1x256xi32>
    %23 = arith.andi %18, %22 : vector<1x256xi1>
    %c-16_i32_5 = arith.constant -16 : i32
    %24 = vector.broadcast %c-16_i32_5 : i32 to vector<1x256xi32>
    %25 = arith.addi %2, %24 : vector<1x256xi32>
    %c0_i32_6 = arith.constant 0 : i32
    %26 = vector.broadcast %c0_i32_6 : i32 to vector<1x256xi32>
    %27 = arith.cmpi sge, %25, %26 : vector<1x256xi32>
    %c-16_i32_7 = arith.constant -16 : i32
    %28 = vector.broadcast %c-16_i32_7 : i32 to vector<1x256xi32>
    %29 = arith.addi %2, %28 : vector<1x256xi32>
    %c256_i32_8 = arith.constant 256 : i32
    %30 = vector.broadcast %c256_i32_8 : i32 to vector<1x256xi32>
    %31 = arith.cmpi slt, %29, %30 : vector<1x256xi32>
    %32 = arith.andi %27, %31 : vector<1x256xi1>
    %c0_i32_9 = arith.constant 0 : i32
    %33 = vector.broadcast %c0_i32_9 : i32 to vector<1x256xi32>
    %34 = arith.addi %4, %33 : vector<1x256xi32>
    %c0_i32_10 = arith.constant 0 : i32
    %35 = vector.broadcast %c0_i32_10 : i32 to vector<1x256xi32>
    %36 = arith.cmpi sge, %34, %35 : vector<1x256xi32>
    %37 = arith.andi %32, %36 : vector<1x256xi1>
    %c0_i32_11 = arith.constant 0 : i32
    %38 = vector.broadcast %c0_i32_11 : i32 to vector<1x256xi32>
    %39 = arith.addi %4, %38 : vector<1x256xi32>
    %c16_i32_12 = arith.constant 16 : i32
    %40 = vector.broadcast %c16_i32_12 : i32 to vector<1x256xi32>
    %41 = arith.cmpi slt, %39, %40 : vector<1x256xi32>
    %42 = arith.andi %37, %41 : vector<1x256xi1>
    %c-16_i32_13 = arith.constant -16 : i32
    %43 = vector.broadcast %c-16_i32_13 : i32 to vector<1x256xi32>
    %44 = arith.addi %2, %43 : vector<1x256xi32>
    %c0_i32_14 = arith.constant 0 : i32
    %45 = vector.broadcast %c0_i32_14 : i32 to vector<1x256xi32>
    %46 = arith.cmpi sge, %44, %45 : vector<1x256xi32>
    %c-16_i32_15 = arith.constant -16 : i32
    %47 = vector.broadcast %c-16_i32_15 : i32 to vector<1x256xi32>
    %48 = arith.addi %2, %47 : vector<1x256xi32>
    %c256_i32_16 = arith.constant 256 : i32
    %49 = vector.broadcast %c256_i32_16 : i32 to vector<1x256xi32>
    %50 = arith.cmpi slt, %48, %49 : vector<1x256xi32>
    %51 = arith.andi %46, %50 : vector<1x256xi1>
    %c1_i32 = arith.constant 1 : i32
    %52 = vector.broadcast %c1_i32 : i32 to vector<1x256xi32>
    %53 = arith.addi %4, %52 : vector<1x256xi32>
    %c0_i32_17 = arith.constant 0 : i32
    %54 = vector.broadcast %c0_i32_17 : i32 to vector<1x256xi32>
    %55 = arith.cmpi sge, %53, %54 : vector<1x256xi32>
    %56 = arith.andi %51, %55 : vector<1x256xi1>
    %c1_i32_18 = arith.constant 1 : i32
    %57 = vector.broadcast %c1_i32_18 : i32 to vector<1x256xi32>
    %58 = arith.addi %4, %57 : vector<1x256xi32>
    %c16_i32_19 = arith.constant 16 : i32
    %59 = vector.broadcast %c16_i32_19 : i32 to vector<1x256xi32>
    %60 = arith.cmpi slt, %58, %59 : vector<1x256xi32>
    %61 = arith.andi %56, %60 : vector<1x256xi1>
    %c0_i32_20 = arith.constant 0 : i32
    %62 = vector.broadcast %c0_i32_20 : i32 to vector<1x256xi32>
    %63 = arith.addi %2, %62 : vector<1x256xi32>
    %c0_i32_21 = arith.constant 0 : i32
    %64 = vector.broadcast %c0_i32_21 : i32 to vector<1x256xi32>
    %65 = arith.cmpi sge, %63, %64 : vector<1x256xi32>
    %c0_i32_22 = arith.constant 0 : i32
    %66 = vector.broadcast %c0_i32_22 : i32 to vector<1x256xi32>
    %67 = arith.addi %2, %66 : vector<1x256xi32>
    %c256_i32_23 = arith.constant 256 : i32
    %68 = vector.broadcast %c256_i32_23 : i32 to vector<1x256xi32>
    %69 = arith.cmpi slt, %67, %68 : vector<1x256xi32>
    %70 = arith.andi %65, %69 : vector<1x256xi1>
    %c-1_i32_24 = arith.constant -1 : i32
    %71 = vector.broadcast %c-1_i32_24 : i32 to vector<1x256xi32>
    %72 = arith.addi %4, %71 : vector<1x256xi32>
    %c0_i32_25 = arith.constant 0 : i32
    %73 = vector.broadcast %c0_i32_25 : i32 to vector<1x256xi32>
    %74 = arith.cmpi sge, %72, %73 : vector<1x256xi32>
    %75 = arith.andi %70, %74 : vector<1x256xi1>
    %c-1_i32_26 = arith.constant -1 : i32
    %76 = vector.broadcast %c-1_i32_26 : i32 to vector<1x256xi32>
    %77 = arith.addi %4, %76 : vector<1x256xi32>
    %c16_i32_27 = arith.constant 16 : i32
    %78 = vector.broadcast %c16_i32_27 : i32 to vector<1x256xi32>
    %79 = arith.cmpi slt, %77, %78 : vector<1x256xi32>
    %80 = arith.andi %75, %79 : vector<1x256xi1>
    %c0_i32_28 = arith.constant 0 : i32
    %81 = vector.broadcast %c0_i32_28 : i32 to vector<1x256xi32>
    %82 = arith.addi %2, %81 : vector<1x256xi32>
    %c0_i32_29 = arith.constant 0 : i32
    %83 = vector.broadcast %c0_i32_29 : i32 to vector<1x256xi32>
    %84 = arith.cmpi sge, %82, %83 : vector<1x256xi32>
    %c0_i32_30 = arith.constant 0 : i32
    %85 = vector.broadcast %c0_i32_30 : i32 to vector<1x256xi32>
    %86 = arith.addi %2, %85 : vector<1x256xi32>
    %c256_i32_31 = arith.constant 256 : i32
    %87 = vector.broadcast %c256_i32_31 : i32 to vector<1x256xi32>
    %88 = arith.cmpi slt, %86, %87 : vector<1x256xi32>
    %89 = arith.andi %84, %88 : vector<1x256xi1>
    %c0_i32_32 = arith.constant 0 : i32
    %90 = vector.broadcast %c0_i32_32 : i32 to vector<1x256xi32>
    %91 = arith.addi %4, %90 : vector<1x256xi32>
    %c0_i32_33 = arith.constant 0 : i32
    %92 = vector.broadcast %c0_i32_33 : i32 to vector<1x256xi32>
    %93 = arith.cmpi sge, %91, %92 : vector<1x256xi32>
    %94 = arith.andi %89, %93 : vector<1x256xi1>
    %c0_i32_34 = arith.constant 0 : i32
    %95 = vector.broadcast %c0_i32_34 : i32 to vector<1x256xi32>
    %96 = arith.addi %4, %95 : vector<1x256xi32>
    %c16_i32_35 = arith.constant 16 : i32
    %97 = vector.broadcast %c16_i32_35 : i32 to vector<1x256xi32>
    %98 = arith.cmpi slt, %96, %97 : vector<1x256xi32>
    %99 = arith.andi %94, %98 : vector<1x256xi1>
    %c0_i32_36 = arith.constant 0 : i32
    %100 = vector.broadcast %c0_i32_36 : i32 to vector<1x256xi32>
    %101 = arith.addi %2, %100 : vector<1x256xi32>
    %c0_i32_37 = arith.constant 0 : i32
    %102 = vector.broadcast %c0_i32_37 : i32 to vector<1x256xi32>
    %103 = arith.cmpi sge, %101, %102 : vector<1x256xi32>
    %c0_i32_38 = arith.constant 0 : i32
    %104 = vector.broadcast %c0_i32_38 : i32 to vector<1x256xi32>
    %105 = arith.addi %2, %104 : vector<1x256xi32>
    %c256_i32_39 = arith.constant 256 : i32
    %106 = vector.broadcast %c256_i32_39 : i32 to vector<1x256xi32>
    %107 = arith.cmpi slt, %105, %106 : vector<1x256xi32>
    %108 = arith.andi %103, %107 : vector<1x256xi1>
    %c1_i32_40 = arith.constant 1 : i32
    %109 = vector.broadcast %c1_i32_40 : i32 to vector<1x256xi32>
    %110 = arith.addi %4, %109 : vector<1x256xi32>
    %c0_i32_41 = arith.constant 0 : i32
    %111 = vector.broadcast %c0_i32_41 : i32 to vector<1x256xi32>
    %112 = arith.cmpi sge, %110, %111 : vector<1x256xi32>
    %113 = arith.andi %108, %112 : vector<1x256xi1>
    %c1_i32_42 = arith.constant 1 : i32
    %114 = vector.broadcast %c1_i32_42 : i32 to vector<1x256xi32>
    %115 = arith.addi %4, %114 : vector<1x256xi32>
    %c16_i32_43 = arith.constant 16 : i32
    %116 = vector.broadcast %c16_i32_43 : i32 to vector<1x256xi32>
    %117 = arith.cmpi slt, %115, %116 : vector<1x256xi32>
    %118 = arith.andi %113, %117 : vector<1x256xi1>
    %c16_i32_44 = arith.constant 16 : i32
    %119 = vector.broadcast %c16_i32_44 : i32 to vector<1x256xi32>
    %120 = arith.addi %2, %119 : vector<1x256xi32>
    %c0_i32_45 = arith.constant 0 : i32
    %121 = vector.broadcast %c0_i32_45 : i32 to vector<1x256xi32>
    %122 = arith.cmpi sge, %120, %121 : vector<1x256xi32>
    %c16_i32_46 = arith.constant 16 : i32
    %123 = vector.broadcast %c16_i32_46 : i32 to vector<1x256xi32>
    %124 = arith.addi %2, %123 : vector<1x256xi32>
    %c256_i32_47 = arith.constant 256 : i32
    %125 = vector.broadcast %c256_i32_47 : i32 to vector<1x256xi32>
    %126 = arith.cmpi slt, %124, %125 : vector<1x256xi32>
    %127 = arith.andi %122, %126 : vector<1x256xi1>
    %c-1_i32_48 = arith.constant -1 : i32
    %128 = vector.broadcast %c-1_i32_48 : i32 to vector<1x256xi32>
    %129 = arith.addi %4, %128 : vector<1x256xi32>
    %c0_i32_49 = arith.constant 0 : i32
    %130 = vector.broadcast %c0_i32_49 : i32 to vector<1x256xi32>
    %131 = arith.cmpi sge, %129, %130 : vector<1x256xi32>
    %132 = arith.andi %127, %131 : vector<1x256xi1>
    %c-1_i32_50 = arith.constant -1 : i32
    %133 = vector.broadcast %c-1_i32_50 : i32 to vector<1x256xi32>
    %134 = arith.addi %4, %133 : vector<1x256xi32>
    %c16_i32_51 = arith.constant 16 : i32
    %135 = vector.broadcast %c16_i32_51 : i32 to vector<1x256xi32>
    %136 = arith.cmpi slt, %134, %135 : vector<1x256xi32>
    %137 = arith.andi %132, %136 : vector<1x256xi1>
    %c16_i32_52 = arith.constant 16 : i32
    %138 = vector.broadcast %c16_i32_52 : i32 to vector<1x256xi32>
    %139 = arith.addi %2, %138 : vector<1x256xi32>
    %c0_i32_53 = arith.constant 0 : i32
    %140 = vector.broadcast %c0_i32_53 : i32 to vector<1x256xi32>
    %141 = arith.cmpi sge, %139, %140 : vector<1x256xi32>
    %c16_i32_54 = arith.constant 16 : i32
    %142 = vector.broadcast %c16_i32_54 : i32 to vector<1x256xi32>
    %143 = arith.addi %2, %142 : vector<1x256xi32>
    %c256_i32_55 = arith.constant 256 : i32
    %144 = vector.broadcast %c256_i32_55 : i32 to vector<1x256xi32>
    %145 = arith.cmpi slt, %143, %144 : vector<1x256xi32>
    %146 = arith.andi %141, %145 : vector<1x256xi1>
    %c0_i32_56 = arith.constant 0 : i32
    %147 = vector.broadcast %c0_i32_56 : i32 to vector<1x256xi32>
    %148 = arith.addi %4, %147 : vector<1x256xi32>
    %c0_i32_57 = arith.constant 0 : i32
    %149 = vector.broadcast %c0_i32_57 : i32 to vector<1x256xi32>
    %150 = arith.cmpi sge, %148, %149 : vector<1x256xi32>
    %151 = arith.andi %146, %150 : vector<1x256xi1>
    %c0_i32_58 = arith.constant 0 : i32
    %152 = vector.broadcast %c0_i32_58 : i32 to vector<1x256xi32>
    %153 = arith.addi %4, %152 : vector<1x256xi32>
    %c16_i32_59 = arith.constant 16 : i32
    %154 = vector.broadcast %c16_i32_59 : i32 to vector<1x256xi32>
    %155 = arith.cmpi slt, %153, %154 : vector<1x256xi32>
    %156 = arith.andi %151, %155 : vector<1x256xi1>
    %c16_i32_60 = arith.constant 16 : i32
    %157 = vector.broadcast %c16_i32_60 : i32 to vector<1x256xi32>
    %158 = arith.addi %2, %157 : vector<1x256xi32>
    %c0_i32_61 = arith.constant 0 : i32
    %159 = vector.broadcast %c0_i32_61 : i32 to vector<1x256xi32>
    %160 = arith.cmpi sge, %158, %159 : vector<1x256xi32>
    %c16_i32_62 = arith.constant 16 : i32
    %161 = vector.broadcast %c16_i32_62 : i32 to vector<1x256xi32>
    %162 = arith.addi %2, %161 : vector<1x256xi32>
    %c256_i32_63 = arith.constant 256 : i32
    %163 = vector.broadcast %c256_i32_63 : i32 to vector<1x256xi32>
    %164 = arith.cmpi slt, %162, %163 : vector<1x256xi32>
    %165 = arith.andi %160, %164 : vector<1x256xi1>
    %c1_i32_64 = arith.constant 1 : i32
    %166 = vector.broadcast %c1_i32_64 : i32 to vector<1x256xi32>
    %167 = arith.addi %4, %166 : vector<1x256xi32>
    %c0_i32_65 = arith.constant 0 : i32
    %168 = vector.broadcast %c0_i32_65 : i32 to vector<1x256xi32>
    %169 = arith.cmpi sge, %167, %168 : vector<1x256xi32>
    %170 = arith.andi %165, %169 : vector<1x256xi1>
    %c1_i32_66 = arith.constant 1 : i32
    %171 = vector.broadcast %c1_i32_66 : i32 to vector<1x256xi32>
    %172 = arith.addi %4, %171 : vector<1x256xi32>
    %c16_i32_67 = arith.constant 16 : i32
    %173 = vector.broadcast %c16_i32_67 : i32 to vector<1x256xi32>
    %174 = arith.cmpi slt, %172, %173 : vector<1x256xi32>
    %175 = arith.andi %170, %174 : vector<1x256xi1>
    %c17_i32 = arith.constant 17 : i32
    %176 = tpu.dynamic_rotate %1 by %c17_i32 dim 1 : vector<8x256xf32>, i32 -> vector<8x256xf32>
    %cst = arith.constant 0.000000e+00 : f32
    %177 = vector.shape_cast %23 : vector<1x256xi1> to vector<1x256xi1>
    %178 = vector.broadcast %177 : vector<1x256xi1> to vector<8x256xi1>
    %179 = vector.broadcast %cst : f32 to vector<8x256xf32>
    %180 = arith.select %178, %176, %179 : vector<8x256xi1>, vector<8x256xf32>
    %c16_i32_68 = arith.constant 16 : i32
    %181 = tpu.dynamic_rotate %1 by %c16_i32_68 dim 1 : vector<8x256xf32>, i32 -> vector<8x256xf32>
    %cst_69 = arith.constant 0.000000e+00 : f32
    %182 = vector.shape_cast %42 : vector<1x256xi1> to vector<1x256xi1>
    %183 = vector.broadcast %182 : vector<1x256xi1> to vector<8x256xi1>
    %184 = vector.broadcast %cst_69 : f32 to vector<8x256xf32>
    %185 = arith.select %183, %181, %184 : vector<8x256xi1>, vector<8x256xf32>
    %c15_i32_70 = arith.constant 15 : i32
    %186 = tpu.dynamic_rotate %1 by %c15_i32_70 dim 1 : vector<8x256xf32>, i32 -> vector<8x256xf32>
    %cst_71 = arith.constant 0.000000e+00 : f32
    %187 = vector.shape_cast %61 : vector<1x256xi1> to vector<1x256xi1>
    %188 = vector.broadcast %187 : vector<1x256xi1> to vector<8x256xi1>
    %189 = vector.broadcast %cst_71 : f32 to vector<8x256xf32>
    %190 = arith.select %188, %186, %189 : vector<8x256xi1>, vector<8x256xf32>
    %c1_i32_72 = arith.constant 1 : i32
    %191 = tpu.dynamic_rotate %1 by %c1_i32_72 dim 1 : vector<8x256xf32>, i32 -> vector<8x256xf32>
    %cst_73 = arith.constant 0.000000e+00 : f32
    %192 = vector.shape_cast %80 : vector<1x256xi1> to vector<1x256xi1>
    %193 = vector.broadcast %192 : vector<1x256xi1> to vector<8x256xi1>
    %194 = vector.broadcast %cst_73 : f32 to vector<8x256xf32>
    %195 = arith.select %193, %191, %194 : vector<8x256xi1>, vector<8x256xf32>
    %cst_74 = arith.constant 0.000000e+00 : f32
    %196 = vector.shape_cast %99 : vector<1x256xi1> to vector<1x256xi1>
    %197 = vector.broadcast %196 : vector<1x256xi1> to vector<8x256xi1>
    %198 = vector.broadcast %cst_74 : f32 to vector<8x256xf32>
    %199 = arith.select %197, %1, %198 : vector<8x256xi1>, vector<8x256xf32>
    %c255_i32 = arith.constant 255 : i32
    %200 = tpu.dynamic_rotate %1 by %c255_i32 dim 1 : vector<8x256xf32>, i32 -> vector<8x256xf32>
    %cst_75 = arith.constant 0.000000e+00 : f32
    %201 = vector.shape_cast %118 : vector<1x256xi1> to vector<1x256xi1>
    %202 = vector.broadcast %201 : vector<1x256xi1> to vector<8x256xi1>
    %203 = vector.broadcast %cst_75 : f32 to vector<8x256xf32>
    %204 = arith.select %202, %200, %203 : vector<8x256xi1>, vector<8x256xf32>
    %c241_i32 = arith.constant 241 : i32
    %205 = tpu.dynamic_rotate %1 by %c241_i32 dim 1 : vector<8x256xf32>, i32 -> vector<8x256xf32>
    %cst_76 = arith.constant 0.000000e+00 : f32
    %206 = vector.shape_cast %137 : vector<1x256xi1> to vector<1x256xi1>
    %207 = vector.broadcast %206 : vector<1x256xi1> to vector<8x256xi1>
    %208 = vector.broadcast %cst_76 : f32 to vector<8x256xf32>
    %209 = arith.select %207, %205, %208 : vector<8x256xi1>, vector<8x256xf32>
    %c240_i32 = arith.constant 240 : i32
    %210 = tpu.dynamic_rotate %1 by %c240_i32 dim 1 : vector<8x256xf32>, i32 -> vector<8x256xf32>
    %cst_77 = arith.constant 0.000000e+00 : f32
    %211 = vector.shape_cast %156 : vector<1x256xi1> to vector<1x256xi1>
    %212 = vector.broadcast %211 : vector<1x256xi1> to vector<8x256xi1>
    %213 = vector.broadcast %cst_77 : f32 to vector<8x256xf32>
    %214 = arith.select %212, %210, %213 : vector<8x256xi1>, vector<8x256xf32>
    %c239_i32 = arith.constant 239 : i32
    %215 = tpu.dynamic_rotate %1 by %c239_i32 dim 1 : vector<8x256xf32>, i32 -> vector<8x256xf32>
    %cst_78 = arith.constant 0.000000e+00 : f32
    %216 = vector.shape_cast %175 : vector<1x256xi1> to vector<1x256xi1>
    %217 = vector.broadcast %216 : vector<1x256xi1> to vector<8x256xi1>
    %218 = vector.broadcast %cst_78 : f32 to vector<8x256xf32>
    %219 = arith.select %217, %215, %218 : vector<8x256xi1>, vector<8x256xf32>
    %220 = tpu.concatenate %180, %185, %190, %195, %199, %204, %209, %214, %219 in 0 : vector<8x256xf32>, vector<8x256xf32>, vector<8x256xf32>, vector<8x256xf32>, vector<8x256xf32>, vector<8x256xf32>, vector<8x256xf32>, vector<8x256xf32>, vector<8x256xf32> -> vector<72x256xf32>
    %c0_79 = arith.constant 0 : index
    %c0_80 = arith.constant 0 : index
    %221 = vector.load %arg2[%c0_79, %c0_80] : memref<8x72xf32, #tpu.memory_space<vmem>>, vector<8x72xf32>
    %cst_81 = arith.constant dense<0.000000e+00> : vector<8x256xf32>
    %222 = tpu.matmul %221, %220, %cst_81 {dimension_numbers = #tpu.dot_dimension_numbers<[1], [0], [0], [1], [0, 0, 1, 1], [], []>} : vector<8x72xf32>, vector<72x256xf32>, vector<8x256xf32> -> vector<8x256xf32>
    %c0_82 = arith.constant 0 : index
    %c0_83 = arith.constant 0 : index
    %223 = vector.load %arg3[%c0_82, %c0_83] : memref<8x1xf32, #tpu.memory_space<vmem>>, vector<8x1xf32>
    %224 = vector.broadcast %223 : vector<8x1xf32> to vector<8x256xf32>
    %225 = arith.mulf %222, %224 : vector<8x256xf32>
    %c0_84 = arith.constant 0 : index
    %c0_85 = arith.constant 0 : index
    %226 = vector.load %arg4[%c0_84, %c0_85] : memref<8x1xf32, #tpu.memory_space<vmem>>, vector<8x1xf32>
    %227 = vector.broadcast %226 : vector<8x1xf32> to vector<8x256xf32>
    %228 = arith.addf %225, %227 : vector<8x256xf32>
    %cst_86 = arith.constant 0.000000e+00 : f32
    %229 = vector.broadcast %cst_86 : f32 to vector<8x256xf32>
    %230 = arith.maximumf %228, %229 : vector<8x256xf32>
    %c17_i32_87 = arith.constant 17 : i32
    %231 = tpu.dynamic_rotate %230 by %c17_i32_87 dim 1 : vector<8x256xf32>, i32 -> vector<8x256xf32>
    %cst_88 = arith.constant 0.000000e+00 : f32
    %232 = vector.shape_cast %23 : vector<1x256xi1> to vector<1x256xi1>
    %233 = vector.broadcast %232 : vector<1x256xi1> to vector<8x256xi1>
    %234 = vector.broadcast %cst_88 : f32 to vector<8x256xf32>
    %235 = arith.select %233, %231, %234 : vector<8x256xi1>, vector<8x256xf32>
    %c16_i32_89 = arith.constant 16 : i32
    %236 = tpu.dynamic_rotate %230 by %c16_i32_89 dim 1 : vector<8x256xf32>, i32 -> vector<8x256xf32>
    %cst_90 = arith.constant 0.000000e+00 : f32
    %237 = vector.shape_cast %42 : vector<1x256xi1> to vector<1x256xi1>
    %238 = vector.broadcast %237 : vector<1x256xi1> to vector<8x256xi1>
    %239 = vector.broadcast %cst_90 : f32 to vector<8x256xf32>
    %240 = arith.select %238, %236, %239 : vector<8x256xi1>, vector<8x256xf32>
    %c15_i32_91 = arith.constant 15 : i32
    %241 = tpu.dynamic_rotate %230 by %c15_i32_91 dim 1 : vector<8x256xf32>, i32 -> vector<8x256xf32>
    %cst_92 = arith.constant 0.000000e+00 : f32
    %242 = vector.shape_cast %61 : vector<1x256xi1> to vector<1x256xi1>
    %243 = vector.broadcast %242 : vector<1x256xi1> to vector<8x256xi1>
    %244 = vector.broadcast %cst_92 : f32 to vector<8x256xf32>
    %245 = arith.select %243, %241, %244 : vector<8x256xi1>, vector<8x256xf32>
    %c1_i32_93 = arith.constant 1 : i32
    %246 = tpu.dynamic_rotate %230 by %c1_i32_93 dim 1 : vector<8x256xf32>, i32 -> vector<8x256xf32>
    %cst_94 = arith.constant 0.000000e+00 : f32
    %247 = vector.shape_cast %80 : vector<1x256xi1> to vector<1x256xi1>
    %248 = vector.broadcast %247 : vector<1x256xi1> to vector<8x256xi1>
    %249 = vector.broadcast %cst_94 : f32 to vector<8x256xf32>
    %250 = arith.select %248, %246, %249 : vector<8x256xi1>, vector<8x256xf32>
    %cst_95 = arith.constant 0.000000e+00 : f32
    %251 = vector.shape_cast %99 : vector<1x256xi1> to vector<1x256xi1>
    %252 = vector.broadcast %251 : vector<1x256xi1> to vector<8x256xi1>
    %253 = vector.broadcast %cst_95 : f32 to vector<8x256xf32>
    %254 = arith.select %252, %230, %253 : vector<8x256xi1>, vector<8x256xf32>
    %c255_i32_96 = arith.constant 255 : i32
    %255 = tpu.dynamic_rotate %230 by %c255_i32_96 dim 1 : vector<8x256xf32>, i32 -> vector<8x256xf32>
    %cst_97 = arith.constant 0.000000e+00 : f32
    %256 = vector.shape_cast %118 : vector<1x256xi1> to vector<1x256xi1>
    %257 = vector.broadcast %256 : vector<1x256xi1> to vector<8x256xi1>
    %258 = vector.broadcast %cst_97 : f32 to vector<8x256xf32>
    %259 = arith.select %257, %255, %258 : vector<8x256xi1>, vector<8x256xf32>
    %c241_i32_98 = arith.constant 241 : i32
    %260 = tpu.dynamic_rotate %230 by %c241_i32_98 dim 1 : vector<8x256xf32>, i32 -> vector<8x256xf32>
    %cst_99 = arith.constant 0.000000e+00 : f32
    %261 = vector.shape_cast %137 : vector<1x256xi1> to vector<1x256xi1>
    %262 = vector.broadcast %261 : vector<1x256xi1> to vector<8x256xi1>
    %263 = vector.broadcast %cst_99 : f32 to vector<8x256xf32>
    %264 = arith.select %262, %260, %263 : vector<8x256xi1>, vector<8x256xf32>
    %c240_i32_100 = arith.constant 240 : i32
    %265 = tpu.dynamic_rotate %230 by %c240_i32_100 dim 1 : vector<8x256xf32>, i32 -> vector<8x256xf32>
    %cst_101 = arith.constant 0.000000e+00 : f32
    %266 = vector.shape_cast %156 : vector<1x256xi1> to vector<1x256xi1>
    %267 = vector.broadcast %266 : vector<1x256xi1> to vector<8x256xi1>
    %268 = vector.broadcast %cst_101 : f32 to vector<8x256xf32>
    %269 = arith.select %267, %265, %268 : vector<8x256xi1>, vector<8x256xf32>
    %c239_i32_102 = arith.constant 239 : i32
    %270 = tpu.dynamic_rotate %230 by %c239_i32_102 dim 1 : vector<8x256xf32>, i32 -> vector<8x256xf32>
    %cst_103 = arith.constant 0.000000e+00 : f32
    %271 = vector.shape_cast %175 : vector<1x256xi1> to vector<1x256xi1>
    %272 = vector.broadcast %271 : vector<1x256xi1> to vector<8x256xi1>
    %273 = vector.broadcast %cst_103 : f32 to vector<8x256xf32>
    %274 = arith.select %272, %270, %273 : vector<8x256xi1>, vector<8x256xf32>
    %275 = tpu.concatenate %235, %240, %245, %250, %254, %259, %264, %269, %274 in 0 : vector<8x256xf32>, vector<8x256xf32>, vector<8x256xf32>, vector<8x256xf32>, vector<8x256xf32>, vector<8x256xf32>, vector<8x256xf32>, vector<8x256xf32>, vector<8x256xf32> -> vector<72x256xf32>
    %c0_104 = arith.constant 0 : index
    %c0_105 = arith.constant 0 : index
    %276 = vector.load %arg5[%c0_104, %c0_105] : memref<8x72xf32, #tpu.memory_space<vmem>>, vector<8x72xf32>
    %cst_106 = arith.constant dense<0.000000e+00> : vector<8x256xf32>
    %277 = tpu.matmul %276, %275, %cst_106 {dimension_numbers = #tpu.dot_dimension_numbers<[1], [0], [0], [1], [0, 0, 1, 1], [], []>} : vector<8x72xf32>, vector<72x256xf32>, vector<8x256xf32> -> vector<8x256xf32>
    %c0_107 = arith.constant 0 : index
    %c0_108 = arith.constant 0 : index
    %278 = vector.load %arg6[%c0_107, %c0_108] : memref<8x1xf32, #tpu.memory_space<vmem>>, vector<8x1xf32>
    %279 = vector.broadcast %278 : vector<8x1xf32> to vector<8x256xf32>
    %280 = arith.mulf %277, %279 : vector<8x256xf32>
    %c0_109 = arith.constant 0 : index
    %c0_110 = arith.constant 0 : index
    %281 = vector.load %arg7[%c0_109, %c0_110] : memref<8x1xf32, #tpu.memory_space<vmem>>, vector<8x1xf32>
    %282 = vector.broadcast %281 : vector<8x1xf32> to vector<8x256xf32>
    %283 = arith.addf %280, %282 : vector<8x256xf32>
    %284 = arith.addf %283, %1 : vector<8x256xf32>
    %cst_111 = arith.constant 0.000000e+00 : f32
    %285 = vector.broadcast %cst_111 : f32 to vector<8x256xf32>
    %286 = arith.maximumf %284, %285 : vector<8x256xf32>
    %c0_112 = arith.constant 0 : index
    %c0_113 = arith.constant 0 : index
    %c0_114 = arith.constant 0 : index
    %287 = vector.load %arg8[%c0_112, %c0_113, %c0_114] : memref<1x8x256xf32, #tpu.memory_space<vmem>>, vector<1x8x256xf32>
    %288 = vector.shape_cast %287 : vector<1x8x256xf32> to vector<8x256xf32>
    %289 = vector.shape_cast %286 : vector<8x256xf32> to vector<1x8x256xf32>
    tpu.vector_store %arg8[%c0_112, %c0_113, %c0_114], %289 {strides = array<i32>} : memref<1x8x256xf32, #tpu.memory_space<vmem>>, vector<1x8x256xf32>,
    return
  }
  func.func @transform_0(%arg0: i32) -> (i32, i32, i32) {
    %c0_i32 = arith.constant 0 : i32
    %c0_i32_0 = arith.constant 0 : i32
    %c0_i32_1 = arith.constant 0 : i32
    return %arg0, %c0_i32, %c0_i32_0 : i32, i32, i32
  }
  func.func @transform_1(%arg0: i32) -> (i32, i32) {
    %c0_i32 = arith.constant 0 : i32
    %c0_i32_0 = arith.constant 0 : i32
    %c0_i32_1 = arith.constant 0 : i32
    return %c0_i32, %c0_i32_0 : i32, i32
  }
  func.func @transform_2(%arg0: i32) -> (i32, i32) {
    %c0_i32 = arith.constant 0 : i32
    %c0_i32_0 = arith.constant 0 : i32
    %c0_i32_1 = arith.constant 0 : i32
    return %c0_i32, %c0_i32_0 : i32, i32
  }
  func.func @transform_3(%arg0: i32) -> (i32, i32) {
    %c0_i32 = arith.constant 0 : i32
    %c0_i32_0 = arith.constant 0 : i32
    %c0_i32_1 = arith.constant 0 : i32
    return %c0_i32, %c0_i32_0 : i32, i32
  }
  func.func @transform_4(%arg0: i32) -> (i32, i32) {
    %c0_i32 = arith.constant 0 : i32
    %c0_i32_0 = arith.constant 0 : i32
    %c0_i32_1 = arith.constant 0 : i32
    return %c0_i32, %c0_i32_0 : i32, i32
  }
  func.func @transform_5(%arg0: i32) -> (i32, i32) {
    %c0_i32 = arith.constant 0 : i32
    %c0_i32_0 = arith.constant 0 : i32
    %c0_i32_1 = arith.constant 0 : i32
    return %c0_i32, %c0_i32_0 : i32, i32
  }
  func.func @transform_6(%arg0: i32) -> (i32, i32) {
    %c0_i32 = arith.constant 0 : i32
    %c0_i32_0 = arith.constant 0 : i32
    %c0_i32_1 = arith.constant 0 : i32
    return %c0_i32, %c0_i32_0 : i32, i32
  }
  func.func @transform_7(%arg0: i32) -> (i32, i32, i32) {
    %c0_i32 = arith.constant 0 : i32
    %c0_i32_0 = arith.constant 0 : i32
    %c0_i32_1 = arith.constant 0 : i32
    return %arg0, %c0_i32, %c0_i32_0 : i32, i32, i32
  }
}

</mosaic_0001>

<llo_original>
// kernel: tpu_custom_call.1
$region0: #{tpu_custom_call.1}
  #allocation0 [shape = 'u32[]', space=smem, size = 0x4, offset = 0x4, fixed_abs, tag = 'smem constant byte address 0x4 - core index']
  #allocation1 [shape = 'u32[144,128]{1,0:T(1,128)}', space=vmem, size = 0x12000, scoped, tag = 'internal scratch']
  %s0 = inlined_call_operand.vmem [shape: f32[2,8,256], index: 0, kind: input, shape index: {}]
  %s1 = inlined_call_operand.hbm [shape: f32[8,72], index: 1, kind: input, shape index: {}]
  %s2 = inlined_call_operand.vmem [shape: f32[8,1], index: 2, kind: input, shape index: {}]
  %s3 = inlined_call_operand.vmem [shape: f32[8,1], index: 3, kind: input, shape index: {}]
  %s4 = inlined_call_operand.vmem [shape: f32[8,72], index: 4, kind: input, shape index: {}]
  %s5 = inlined_call_operand.vmem [shape: f32[8,1], index: 5, kind: input, shape index: {}]
  %s6 = inlined_call_operand.vmem [shape: f32[8,1], index: 6, kind: input, shape index: {}]
  %s7 = inlined_call_operand.hbm [shape: f32[2,8,256], index: 7, kind: output, shape index: {}]
  %s8 = sld [smem:[#allocation0]]
  $region65: #{tpu_custom_call.1} parent=0
    _
  %s10 = ssub.s32 1, %s8
  %s11 = scalar_select 0, %s10, %s8
  $region1: #{tpu_custom_call.1} parent=0
    #allocation2 [shape = 'u8[4096]{0}', space=vmem, size = 0x1000, scoped, tag = 'input window, operand 1, single buffered']
    #allocation3 [shape = 's32[2]{0}', space=sflag, size = 0x8, scoped, tag = 'scoped memory for tpu_custom_call.1']
    #allocation4 [shape = 's32[2]{0}', space=sflag, size = 0x8, scoped, tag = 'scoped memory for tpu_custom_call.1']
    #allocation5 [shape = 'u8[16384]{0}', space=vmem, size = 0x4000, scoped, tag = 'output window, operand 0']
    %12 = vsyncpa [#allocation3], 0
    %13 = vsyncpa [#allocation4], 0
    %s14 = scalar_lea.sflag [#allocation4], 1
    %15 = vsyncpa %s14, 0
    loop: start=0, step=1, limit=4
    $region2: #{tpu_custom_call.1} parent=1 // loop_pre_header
      _
    $region3: #{tpu_custom_call.1} parent=1 // loop_header
      %s17 = sphi 0, %s21
      %p18 = scmp.ge.s32.totalorder %s17, 4
      %s27 = sphi 0, %s29
      %s30 = sphi 0, %s27
      %s31 = sphi 0, %s30
      %s47 = sphi 0, %s31
      %s51 = sphi 0, %s51
      %s53 = sphi 0, %s51
      %s54 = sphi 0, %s53
      %s68 = sphi 0, %s54
      %s72 = sphi 0, %s72
      %s74 = sphi 0, %s72
      %s75 = sphi 0, %s74
      %s89 = sphi 0, %s75
      %s93 = sphi 0, %s93
      %s95 = sphi 0, %s93
      %s96 = sphi 0, %s95
      %s110 = sphi 0, %s96
      %s114 = sphi 0, %s114
      %s116 = sphi 0, %s114
      %s117 = sphi 0, %s116
      %s131 = sphi 0, %s117
      %s135 = sphi 0, %s135
      %s137 = sphi 0, %s135
      %s138 = sphi 0, %s137
      %s152 = sphi 0, %s138
      %s156 = sphi 0, %s156
      %s158 = sphi 0, %s156
      %s159 = sphi 0, %s158
      %s173 = sphi 0, %s159
      %s179 = sphi 0, %s181
      %s182 = sphi 0, %s179
      %s183 = sphi 0, %s182
      %s199 = sphi 0, %s183
    $region4: #{tpu_custom_call.1} parent=1 // loop_header_branch
      %20 = sbr.rel (%p18) target = $region8
    $region5: #{tpu_custom_call.1} parent=1 // loop_body
      %s22 = ssub.s32 %s17, 1
      %s23 = ssub.s32 %s17, 2
      %s24 = sadd.s32 %s17, 1
      %s25 = ssub.s32 %s17, %s24
      %p26 = scmp.eq.s32.totalorder %s25, 0
      %s28 = sadd.s32 %s27, 1
      %s29 = scalar_select %p26, %s27, %s28
      %p32 = pneg %p26
      %p33 = scmp.eq.s32.totalorder %s17, 1
      %p34 = por %p32, %p33
      %p35 = scmp.ne.s32.totalorder %s27, %s30
      %p36 = scmp.eq.s32.totalorder %s17, 0
      %p37 = por %p35, %p36
      %p38 = scmp.ne.s32.totalorder %s27, %s30
      %p39 = scmp.eq.s32.totalorder %s22, 1
      %p40 = por %p38, %p39
      %p41 = scmp.ne.s32.totalorder %s30, %s31
      %p42 = scmp.eq.s32.totalorder %s22, 0
      %p43 = por %p41, %p42
      %p44 = scmp.ne.s32.totalorder %s30, %s31
      %p45 = scmp.eq.s32.totalorder %s23, 1
      %p46 = por %p44, %p45
      %p48 = scmp.ne.s32.totalorder %s31, %s47
      %p49 = scmp.eq.s32.totalorder %s23, 0
      %p50 = por %p48, %p49
      %s52 = sadd.s32 %s51, 1
      %p55 = scmp.eq.s32.totalorder %s17, 1
      %p56 = scmp.ne.s32.totalorder %s51, %s53
      %p57 = scmp.eq.s32.totalorder %s17, 0
      %p58 = por %p56, %p57
      %p59 = scmp.ne.s32.totalorder %s51, %s53
      %p60 = scmp.eq.s32.totalorder %s22, 1
      %p61 = por %p59, %p60
      %p62 = scmp.ne.s32.totalorder %s53, %s54
      %p63 = scmp.eq.s32.totalorder %s22, 0
      %p64 = por %p62, %p63
      %p65 = scmp.ne.s32.totalorder %s53, %s54
      %p66 = scmp.eq.s32.totalorder %s23, 1
      %p67 = por %p65, %p66
      %p69 = scmp.ne.s32.totalorder %s54, %s68
      %p70 = scmp.eq.s32.totalorder %s23, 0
      %p71 = por %p69, %p70
      %s73 = sadd.s32 %s72, 1
      %p76 = scmp.eq.s32.totalorder %s17, 1
      %p77 = scmp.ne.s32.totalorder %s72, %s74
      %p78 = scmp.eq.s32.totalorder %s17, 0
      %p79 = por %p77, %p78
      %p80 = scmp.ne.s32.totalorder %s72, %s74
      %p81 = scmp.eq.s32.totalorder %s22, 1
      %p82 = por %p80, %p81
      %p83 = scmp.ne.s32.totalorder %s74, %s75
      %p84 = scmp.eq.s32.totalorder %s22, 0
      %p85 = por %p83, %p84
      %p86 = scmp.ne.s32.totalorder %s74, %s75
      %p87 = scmp.eq.s32.totalorder %s23, 1
      %p88 = por %p86, %p87
      %p90 = scmp.ne.s32.totalorder %s75, %s89
      %p91 = scmp.eq.s32.totalorder %s23, 0
      %p92 = por %p90, %p91
      %s94 = sadd.s32 %s93, 1
      %p97 = scmp.eq.s32.totalorder %s17, 1
      %p98 = scmp.ne.s32.totalorder %s93, %s95
      %p99 = scmp.eq.s32.totalorder %s17, 0
      %p100 = por %p98, %p99
      %p101 = scmp.ne.s32.totalorder %s93, %s95
      %p102 = scmp.eq.s32.totalorder %s22, 1
      %p103 = por %p101, %p102
      %p104 = scmp.ne.s32.totalorder %s95, %s96
      %p105 = scmp.eq.s32.totalorder %s22, 0
      %p106 = por %p104, %p105
      %p107 = scmp.ne.s32.totalorder %s95, %s96
      %p108 = scmp.eq.s32.totalorder %s23, 1
      %p109 = por %p107, %p108
      %p111 = scmp.ne.s32.totalorder %s96, %s110
      %p112 = scmp.eq.s32.totalorder %s23, 0
      %p113 = por %p111, %p112
      %s115 = sadd.s32 %s114, 1
      %p118 = scmp.eq.s32.totalorder %s17, 1
      %p119 = scmp.ne.s32.totalorder %s114, %s116
      %p120 = scmp.eq.s32.totalorder %s17, 0
      %p121 = por %p119, %p120
      %p122 = scmp.ne.s32.totalorder %s114, %s116
      %p123 = scmp.eq.s32.totalorder %s22, 1
      %p124 = por %p122, %p123
      %p125 = scmp.ne.s32.totalorder %s116, %s117
      %p126 = scmp.eq.s32.totalorder %s22, 0
      %p127 = por %p125, %p126
      %p128 = scmp.ne.s32.totalorder %s116, %s117
      %p129 = scmp.eq.s32.totalorder %s23, 1
      %p130 = por %p128, %p129
      %p132 = scmp.ne.s32.totalorder %s117, %s131
      %p133 = scmp.eq.s32.totalorder %s23, 0
      %p134 = por %p132, %p133
      %s136 = sadd.s32 %s135, 1
      %p139 = scmp.eq.s32.totalorder %s17, 1
      %p140 = scmp.ne.s32.totalorder %s135, %s137
      %p141 = scmp.eq.s32.totalorder %s17, 0
      %p142 = por %p140, %p141
      %p143 = scmp.ne.s32.totalorder %s135, %s137
      %p144 = scmp.eq.s32.totalorder %s22, 1
      %p145 = por %p143, %p144
      %p146 = scmp.ne.s32.totalorder %s137, %s138
      %p147 = scmp.eq.s32.totalorder %s22, 0
      %p148 = por %p146, %p147
      %p149 = scmp.ne.s32.totalorder %s137, %s138
      %p150 = scmp.eq.s32.totalorder %s23, 1
      %p151 = por %p149, %p150
      %p153 = scmp.ne.s32.totalorder %s138, %s152
      %p154 = scmp.eq.s32.totalorder %s23, 0
      %p155 = por %p153, %p154
      %s157 = sadd.s32 %s156, 1
      %p160 = scmp.eq.s32.totalorder %s17, 1
      %p161 = scmp.ne.s32.totalorder %s156, %s158
      %p162 = scmp.eq.s32.totalorder %s17, 0
      %p163 = por %p161, %p162
      %p164 = scmp.ne.s32.totalorder %s156, %s158
      %p165 = scmp.eq.s32.totalorder %s22, 1
      %p166 = por %p164, %p165
      %p167 = scmp.ne.s32.totalorder %s158, %s159
      %p168 = scmp.eq.s32.totalorder %s22, 0
      %p169 = por %p167, %p168
      %p170 = scmp.ne.s32.totalorder %s158, %s159
      %p171 = scmp.eq.s32.totalorder %s23, 1
      %p172 = por %p170, %p171
      %p174 = scmp.ne.s32.totalorder %s159, %s173
      %p175 = scmp.eq.s32.totalorder %s23, 0
      %p176 = por %p174, %p175
      %s177 = ssub.s32 %s17, %s24
      %p178 = scmp.eq.s32.totalorder %s177, 0
      %s180 = sadd.s32 %s179, 1
      %s181 = scalar_select %p178, %s179, %s180
      %p184 = pneg %p178
      %p185 = scmp.eq.s32.totalorder %s17, 1
      %p186 = por %p184, %p185
      %p187 = scmp.ne.s32.totalorder %s179, %s182
      %p188 = scmp.eq.s32.totalorder %s17, 0
      %p189 = por %p187, %p188
      %p190 = scmp.ne.s32.totalorder %s179, %s182
      %p191 = scmp.eq.s32.totalorder %s22, 1
      %p192 = por %p190, %p191
      %p193 = scmp.ne.s32.totalorder %s182, %s183
      %p194 = scmp.eq.s32.totalorder %s22, 0
      %p195 = por %p193, %p194
      %p196 = scmp.ne.s32.totalorder %s182, %s183
      %p197 = scmp.eq.s32.totalorder %s23, 1
      %p198 = por %p196, %p197
      %p200 = scmp.ne.s32.totalorder %s183, %s199
      %p201 = scmp.eq.s32.totalorder %s23, 0
      %p202 = por %p200, %p201
      %p203 = scmp.le.s32.totalorder 1, %s17
      %p204 = scmp.lt.s32.totalorder %s17, 3
      %p205 = pnand %p203, %p204
      %p206 = pneg %p205
      // Predicated region
      $region9: #{tpu_custom_call.1} parent=5 // pred_check
        _
      $region10: #{tpu_custom_call.1} parent=5 // pred_check_branch
        %208 = sbr.rel (%p205) target = $region12
      $region11: #{tpu_custom_call.1} parent=5 // pred_region
        %s209 = ssub.s32 %s17, 1
        // Predicated region
        $region13: #{tpu_custom_call.1} parent=11 // pred_check
          %p210 = pneg %p64
        $region14: #{tpu_custom_call.1} parent=11 // pred_check_branch
          %212 = sbr.rel (%p210) target = $region16
        $region15: #{tpu_custom_call.1} parent=11 // pred_region
          %s214 = ssub.s32 128, 128
          %215 = vsyncadd [#allocation3], %s214
          %s217 = sshll.u32 [#allocation2], 4
          %s218 = int_to_ptr.vmem [resolvable:$true] %s217
          %220 = dma.hbm_to_vmem [thread:$0]  %s1, 128, %s218, [#allocation3]
        $region16: #{tpu_custom_call.1} parent=11 // pred_fallthru
          _
        // Predicated region
        $region17: #{tpu_custom_call.1} parent=11 // pred_check
          %p221 = pneg %p85
        $region18: #{tpu_custom_call.1} parent=11 // pred_check_branch
          %223 = sbr.rel (%p221) target = $region20
        $region19: #{tpu_custom_call.1} parent=11 // pred_region
          _
        $region20: #{tpu_custom_call.1} parent=11 // pred_fallthru
          _
        // Predicated region
        $region21: #{tpu_custom_call.1} parent=11 // pred_check
          %p224 = pneg %p106
        $region22: #{tpu_custom_call.1} parent=11 // pred_check_branch
          %226 = sbr.rel (%p224) target = $region24
        $region23: #{tpu_custom_call.1} parent=11 // pred_region
          _
        $region24: #{tpu_custom_call.1} parent=11 // pred_fallthru
          _
        // Predicated region
        $region25: #{tpu_custom_call.1} parent=11 // pred_check
          %p227 = pneg %p127
        $region26: #{tpu_custom_call.1} parent=11 // pred_check_branch
          %229 = sbr.rel (%p227) target = $region28
        $region27: #{tpu_custom_call.1} parent=11 // pred_region
          _
        $region28: #{tpu_custom_call.1} parent=11 // pred_fallthru
          _
        // Predicated region
        $region29: #{tpu_custom_call.1} parent=11 // pred_check
          %p230 = pneg %p148
        $region30: #{tpu_custom_call.1} parent=11 // pred_check_branch
          %232 = sbr.rel (%p230) target = $region32
        $region31: #{tpu_custom_call.1} parent=11 // pred_region
          _
        $region32: #{tpu_custom_call.1} parent=11 // pred_fallthru
          _
        // Predicated region
        $region33: #{tpu_custom_call.1} parent=11 // pred_check
          %p233 = pneg %p169
        $region34: #{tpu_custom_call.1} parent=11 // pred_check_branch
          %235 = sbr.rel (%p233) target = $region36
        $region35: #{tpu_custom_call.1} parent=11 // pred_region
          _
        $region36: #{tpu_custom_call.1} parent=11 // pred_fallthru
          _
      $region12: #{tpu_custom_call.1} parent=5 // pred_fallthru
        _
      %p236 = scmp.lt.s32.totalorder %s17, 2
      // Predicated region
      $region37: #{tpu_custom_call.1} parent=5 // pred_check
        %p237 = pneg %p236
      $region38: #{tpu_custom_call.1} parent=5 // pred_check_branch
        %239 = sbr.rel (%p237) target = $region40
      $region39: #{tpu_custom_call.1} parent=5 // pred_region
        // Predicated region
        $region41: #{tpu_custom_call.1} parent=39 // pred_check
          %p240 = pneg %p37
        $region42: #{tpu_custom_call.1} parent=39 // pred_check_branch
          %242 = sbr.rel (%p240) target = $region44
        $region43: #{tpu_custom_call.1} parent=39 // pred_region
          %p243 = scmp.lt.s32.totalorder %s17, 1
          %s244 = scalar_select %p243, %s17, 1
          %s245 = smul.addr %s244, 2
          %s246 = smul.addr %s245, 8
          %s247 = scalar_lea.vmem %s0, %s246
        $region44: #{tpu_custom_call.1} parent=39 // pred_fallthru
          _
      $region40: #{tpu_custom_call.1} parent=5 // pred_fallthru
        _
      %p248 = scmp.le.s32.totalorder 1, %s17
      %p249 = scmp.lt.s32.totalorder %s17, 3
      %p250 = pnand %p248, %p249
      %p251 = pneg %p250
      // Predicated region
      $region45: #{tpu_custom_call.1} parent=5 // pred_check
        _
      $region46: #{tpu_custom_call.1} parent=5 // pred_check_branch
        %253 = sbr.rel (%p250) target = $region48
      $region47: #{tpu_custom_call.1} parent=5 // pred_region
        %s254 = ssub.s32 %s17, 1
        // Predicated region
        $region49: #{tpu_custom_call.1} parent=47 // pred_check
          %p255 = pneg %p64
        $region50: #{tpu_custom_call.1} parent=47 // pred_check_branch
          %257 = sbr.rel (%p255) target = $region52
        $region51: #{tpu_custom_call.1} parent=47 // pred_region
          %258 = dma.done [#allocation3], 128
        $region52: #{tpu_custom_call.1} parent=47 // pred_fallthru
          _
        %p259 = scmp.lt.s32.totalorder %s22, 1
        %s260 = scalar_select %p259, %s22, 1
        %s261 = smul.addr %s260, 2
        %s262 = smul.addr %s261, 8
        %s263 = scalar_lea.vmem %s0, %s262
        %p264 = pneg %p43
        %p265 = pneg %p40
        %p266 = pneg %p64
        %p267 = pneg %p61
        %p268 = pneg %p85
        %p269 = pneg %p82
        %p270 = pneg %p106
        %p271 = pneg %p103
        %p272 = pneg %p127
        %p273 = pneg %p124
        %p274 = pneg %p148
        %p275 = pneg %p145
        %p276 = pneg %p169
        %p277 = pneg %p166
        %p278 = pneg %p195
        %p279 = pneg %p192
        %s280 = sand.u32 %s182, 1
        %s281 = scalar_lea.sflag [#allocation4], %s280
        %s282 = sand.u32 %s182, 1
        %s283 = smul.addr %s282, 16
        %s284 = scalar_lea.vmem [#allocation5], %s283
        %p285 = scmp.lt.s32.totalorder %s22, 1
        %s286 = scalar_select %p285, %s22, 1
        %s287 = smul.addr %s286, 2
        %s288 = smul.addr %s287, 8
        %s289 = scalar_lea.vmem %s0, %s288
        %v290 = vld [vmem:[%s289] sm:$0xff]
        %v291 = vld [vmem:[%s289 + $0x8] sm:$0xff]
        %v292 = vlaneseq
        %v293 = vand.u32 %v292, 127
        %v294 = vadd.s32 %v293, 128
        %v295 = vand.u32 %v293, 15
        %v296 = vand.u32 %v294, 15
        %v297 = vadd.s32 %v293, 4294967280
        %v298 = vadd.s32 %v294, 4294967280
        %vm299 = vcmp.ge.s32.totalorder %v297, 0
        %vm300 = vcmp.ge.s32.totalorder %v298, 0
        %vm301 = vcmp.lt.s32.totalorder %v297, 256
        %vm302 = vcmp.lt.s32.totalorder %v298, 256
        %vm303 = vmand %vm299, %vm301
        %vm304 = vmand %vm300, %vm302
        %v305 = vadd.s32 %v295, 4294967295
        %v306 = vadd.s32 %v296, 4294967295
        %vm307 = vcmp.ge.s32.totalorder %v305, 0
        %vm308 = vcmp.ge.s32.totalorder %v306, 0
        %vm309 = vmand %vm303, %vm307
        %vm310 = vmand %vm304, %vm308
        %vm311 = vcmp.lt.s32.totalorder %v305, 16
        %vm312 = vcmp.lt.s32.totalorder %v306, 16
        %vm313 = vmand %vm309, %vm311
        %vm314 = vmand %vm310, %vm312
        %vm315 = vcmp.ge.s32.totalorder %v295, 0
        %vm316 = vcmp.ge.s32.totalorder %v296, 0
        %vm317 = vmand %vm303, %vm315
        %vm318 = vmand %vm304, %vm316
        %vm319 = vcmp.lt.s32.totalorder %v295, 16
        %vm320 = vcmp.lt.s32.totalorder %v296, 16
        %vm321 = vmand %vm317, %vm319
        %vm322 = vmand %vm318, %vm320
        %v323 = vadd.s32 %v295, 1
        %v324 = vadd.s32 %v296, 1
        %vm325 = vcmp.ge.s32.totalorder %v323, 0
        %vm326 = vcmp.ge.s32.totalorder %v324, 0
        %vm327 = vmand %vm303, %vm325
        %vm328 = vmand %vm304, %vm326
        %vm329 = vcmp.lt.s32.totalorder %v323, 16
        %vm330 = vcmp.lt.s32.totalorder %v324, 16
        %vm331 = vmand %vm327, %vm329
        %vm332 = vmand %vm328, %vm330
        %vm333 = vcmp.ge.s32.totalorder %v293, 0
        %vm334 = vcmp.ge.s32.totalorder %v294, 0
        %vm335 = vcmp.lt.s32.totalorder %v293, 256
        %vm336 = vcmp.lt.s32.totalorder %v294, 256
        %vm337 = vmand %vm333, %vm335
        %vm338 = vmand %vm334, %vm336
        %vm339 = vmand %vm337, %vm307
        %vm340 = vmand %vm338, %vm308
        %vm341 = vmand %vm339, %vm311
        %vm342 = vmand %vm340, %vm312
        %vm343 = vmand %vm337, %vm315
        %vm344 = vmand %vm338, %vm316
        %vm345 = vmand %vm343, %vm319
        %vm346 = vmand %vm344, %vm320
        %vm347 = vmand %vm337, %vm325
        %vm348 = vmand %vm338, %vm326
        %vm349 = vmand %vm347, %vm329
        %vm350 = vmand %vm348, %vm330
        %v351 = vadd.s32 %v293, 16
        %v352 = vadd.s32 %v294, 16
        %vm353 = vcmp.ge.s32.totalorder %v351, 0
        %vm354 = vcmp.ge.s32.totalorder %v352, 0
        %vm355 = vcmp.lt.s32.totalorder %v351, 256
        %vm356 = vcmp.lt.s32.totalorder %v352, 256
        %vm357 = vmand %vm353, %vm355
        %vm358 = vmand %vm354, %vm356
        %vm359 = vmand %vm357, %vm307
        %vm360 = vmand %vm358, %vm308
        %vm361 = vmand %vm359, %vm311
        %vm362 = vmand %vm360, %vm312
        %vm363 = vmand %vm357, %vm315
        %vm364 = vmand %vm358, %vm316
        %vm365 = vmand %vm363, %vm319
        %vm366 = vmand %vm364, %vm320
        %vm367 = vmand %vm357, %vm325
        %vm368 = vmand %vm358, %vm326
        %vm369 = vmand %vm367, %vm329
        %vm370 = vmand %vm368, %vm330
        %371 = vrot.lane.b32.xlu0 %v290, 17
        %v372 = vpop.permute.xlu0 %371
        %373 = vrot.lane.b32.xlu0 %v291, 17
        %v374 = vpop.permute.xlu0 %373
        %vm375 = vcmp.lt.s32.totalorder %v293, 17
        %v376 = vsel %vm375, %v372, %v374
        %v377 = vsel %vm375, %v374, %v372
        %v378 = vsel %vm313, 1, 0
        %v379 = vsel %vm314, 1, 0
        %vm380 = vcmp.eq.s32.totalorder %v378, 1
        %vm381 = vcmp.eq.s32.totalorder %v379, 1
        %v382 = vsel %vm380, %v377, 0.0
        %v383 = vsel %vm381, %v376, 0.0
        %384 = vrot.lane.b32.xlu0 %v290, 16
        %v385 = vpop.permute.xlu0 %384
        %386 = vrot.lane.b32.xlu0 %v291, 16
        %v387 = vpop.permute.xlu0 %386
        %vm388 = vcmp.lt.s32.totalorder %v293, 16
        %v389 = vsel %vm388, %v385, %v387
        %v390 = vsel %vm388, %v387, %v385
        %v391 = vsel %vm321, 1, 0
        %v392 = vsel %vm322, 1, 0
        %vm393 = vcmp.eq.s32.totalorder %v391, 1
        %vm394 = vcmp.eq.s32.totalorder %v392, 1
        %v395 = vsel %vm393, %v390, 0.0
        %v396 = vsel %vm394, %v389, 0.0
        %397 = vrot.lane.b32.xlu0 %v290, 15
        %v398 = vpop.permute.xlu0 %397
        %399 = vrot.lane.b32.xlu0 %v291, 15
        %v400 = vpop.permute.xlu0 %399
        %vm401 = vcmp.lt.s32.totalorder %v293, 15
        %v402 = vsel %vm401, %v398, %v400
        %v403 = vsel %vm401, %v400, %v398
        %v404 = vsel %vm331, 1, 0
        %v405 = vsel %vm332, 1, 0
        %vm406 = vcmp.eq.s32.totalorder %v404, 1
        %vm407 = vcmp.eq.s32.totalorder %v405, 1
        %v408 = vsel %vm406, %v403, 0.0
        %v409 = vsel %vm407, %v402, 0.0
        %410 = vrot.lane.b32.xlu0 %v290, 1
        %v411 = vpop.permute.xlu0 %410
        %412 = vrot.lane.b32.xlu0 %v291, 1
        %v413 = vpop.permute.xlu0 %412
        %vm414 = vcmp.lt.s32.totalorder %v293, 1
        %v415 = vsel %vm414, %v411, %v413
        %v416 = vsel %vm414, %v413, %v411
        %v417 = vsel %vm341, 1, 0
        %v418 = vsel %vm342, 1, 0
        %vm419 = vcmp.eq.s32.totalorder %v417, 1
        %vm420 = vcmp.eq.s32.totalorder %v418, 1
        %v421 = vsel %vm419, %v416, 0.0
        %v422 = vsel %vm420, %v415, 0.0
        %v423 = vsel %vm345, 1, 0
        %v424 = vsel %vm346, 1, 0
        %vm425 = vcmp.eq.s32.totalorder %v423, 1
        %vm426 = vcmp.eq.s32.totalorder %v424, 1
        %v427 = vsel %vm425, %v290, 0.0
        %v428 = vsel %vm426, %v291, 0.0
        %429 = vrot.lane.b32.xlu0 %v290, 127
        %v430 = vpop.permute.xlu0 %429
        %431 = vrot.lane.b32.xlu0 %v291, 127
        %v432 = vpop.permute.xlu0 %431
        %vm433 = vcmp.lt.s32.totalorder %v293, 127
        %v434 = vsel %vm433, %v430, %v432
        %v435 = vsel %vm433, %v432, %v430
        %v436 = vsel %vm349, 1, 0
        %v437 = vsel %vm350, 1, 0
        %vm438 = vcmp.eq.s32.totalorder %v436, 1
        %vm439 = vcmp.eq.s32.totalorder %v437, 1
        %v440 = vsel %vm438, %v434, 0.0
        %v441 = vsel %vm439, %v435, 0.0
        %442 = vrot.lane.b32.xlu0 %v290, 113
        %v443 = vpop.permute.xlu0 %442
        %444 = vrot.lane.b32.xlu0 %v291, 113
        %v445 = vpop.permute.xlu0 %444
        %vm446 = vcmp.lt.s32.totalorder %v293, 113
        %v447 = vsel %vm446, %v443, %v445
        %v448 = vsel %vm446, %v445, %v443
        %v449 = vsel %vm361, 1, 0
        %v450 = vsel %vm362, 1, 0
        %vm451 = vcmp.eq.s32.totalorder %v449, 1
        %vm452 = vcmp.eq.s32.totalorder %v450, 1
        %v453 = vsel %vm451, %v447, 0.0
        %v454 = vsel %vm452, %v448, 0.0
        %455 = vrot.lane.b32.xlu0 %v290, 112
        %v456 = vpop.permute.xlu0 %455
        %457 = vrot.lane.b32.xlu0 %v291, 112
        %v458 = vpop.permute.xlu0 %457
        %vm459 = vcmp.lt.s32.totalorder %v293, 112
        %v460 = vsel %vm459, %v456, %v458
        %v461 = vsel %vm459, %v458, %v456
        %v462 = vsel %vm365, 1, 0
        %v463 = vsel %vm366, 1, 0
        %vm464 = vcmp.eq.s32.totalorder %v462, 1
        %vm465 = vcmp.eq.s32.totalorder %v463, 1
        %v466 = vsel %vm464, %v460, 0.0
        %v467 = vsel %vm465, %v461, 0.0
        %468 = vrot.lane.b32.xlu0 %v290, 111
        %v469 = vpop.permute.xlu0 %468
        %470 = vrot.lane.b32.xlu0 %v291, 111
        %v471 = vpop.permute.xlu0 %470
        %vm472 = vcmp.lt.s32.totalorder %v293, 111
        %v473 = vsel %vm472, %v469, %v471
        %v474 = vsel %vm472, %v471, %v469
        %v475 = vsel %vm369, 1, 0
        %v476 = vsel %vm370, 1, 0
        %vm477 = vcmp.eq.s32.totalorder %v475, 1
        %vm478 = vcmp.eq.s32.totalorder %v476, 1
        %v479 = vsel %vm477, %v473, 0.0
        %v480 = vsel %vm478, %v474, 0.0
        %v481 = vld [vmem:[#allocation2] sm:$0xff]
        %vm482 = vcmask 588800
        %v484 = vsel %vm482, %v481, 0
        %486 = vmatprep.subr.mxu0 %v383
        %487 = vmatpush1.msra.mxu0 %v382
        %488 = vmatprep.subr.mxu0 %v396
        %489 = vmatpush1.msra.mxu0 %v395
        %490 = vmatprep.subr.mxu0 %v409
        %491 = vmatpush1.msra.mxu0 %v408
        %492 = vmatprep.subr.mxu0 %v422
        %493 = vmatpush1.msra.mxu0 %v421
        %494 = vmatprep.subr.mxu0 %v428
        %495 = vmatpush1.msra.mxu0 %v427
        %496 = vmatprep.subr.mxu0 %v441
        %497 = vmatpush1.msra.mxu0 %v440
        %498 = vmatprep.subr.mxu0 %v454
        %499 = vmatpush1.msra.mxu0 %v453
        %500 = vmatprep.subr.mxu0 %v467
        %501 = vmatpush1.msra.mxu0 %v466
        %502 = vmatprep.subr.mxu0 %v480
        %503 = vmatpush1.msra.mxu0 %v479
        %504 = vmatprep.subr.mxu0 0.0
        %505 = vmatpush1.msra.mxu0 0.0
        %506 = vmatprep.subr.mxu0 0.0
        %507 = vmatpush1.msra.mxu0 0.0
        %508 = vmatprep.subr.mxu0 0.0
        %509 = vmatpush1.msra.mxu0 0.0
        %510 = vmatprep.subr.mxu0 0.0
        %511 = vmatpush1.msra.mxu0 0.0
        %512 = vmatprep.subr.mxu0 0.0
        %513 = vmatpush1.msra.mxu0 0.0
        %514 = vmatprep.subr.mxu0 0.0
        %515 = vmatpush1.msra.mxu0 0.0
        %516 = vmatprep.subr.mxu0 0.0
        %517 = vmatpush1.msra.mxu0 0.0
        %518 = vmatprep.subr.mxu0 0.0
        %519 = vmatpush1.msra.mxu0 0.0
        %520 = vmatprep.subr.mxu0 0.0
        %521 = vmatpush1.msra.mxu0 0.0
        %522 = vmatprep.subr.mxu0 0.0
        %523 = vmatpush1.msra.mxu0 0.0
        %524 = vmatprep.subr.mxu0 0.0
        %525 = vmatpush1.msra.mxu0 0.0
        %526 = vmatprep.subr.mxu0 0.0
        %527 = vmatpush1.msra.mxu0 0.0
        %528 = vmatprep.subr.mxu0 0.0
        %529 = vmatpush1.msra.mxu0 0.0
        %530 = vmatprep.subr.mxu0 0.0
        %531 = vmatpush1.msra.mxu0 0.0
        %532 = vmatprep.subr.mxu0 0.0
        %533 = vmatpush1.msra.mxu0 0.0
        %534 = vmatprep.subr.mxu0 0.0
        %535 = vmatpush1.msra.mxu0 0.0
        %536 = vmatprep.subr.mxu0 0.0
        %537 = vmatpush1.msra.mxu0 0.0
        %538 = vmatprep.subr.mxu0 0.0
        %539 = vmatpush1.msra.mxu0 0.0
        %540 = vmatprep.subr.mxu0 0.0
        %541 = vmatpush1.msra.mxu0 0.0
        %542 = vmatprep.subr.mxu0 0.0
        %543 = vmatpush1.msra.mxu0 0.0
        %544 = vmatprep.subr.mxu0 0.0
        %545 = vmatpush1.msra.mxu0 0.0
        %546 = vmatprep.subr.mxu0 0.0
        %547 = vmatpush1.msra.mxu0 0.0
        %548 = vmatprep.subr.mxu0 0.0
        %549 = vmatpush1.msra.mxu0 0.0
        %550 = vmatprep.mubr.f32.mxu0 0.0
        %551 = vmatmul.mubr.f32.gmra.mrb[0].mxu0 %v484
        %v552 = vpop.f32.mrb[0].mxu0
        %v553 = vadd.f32 0.0, %v552
        %v554 = vpop.f32.mrb[0].mxu0
        %v555 = vadd.f32 0.0, %v554
        %556 = vdwg.mxu0
        %v557 = vld [vmem:[%s2] sm:$0xff]
        %559 = vset.pattern.permute.xlu0 0
        %560 = vperm.xlu0 %559, %v557
        %v561 = vpop.permute.xlu0 %560
        %v563 = vmul.f32 %v553, %v561
        %v564 = vmul.f32 %v555, %v561
        %v565 = vld [vmem:[%s3] sm:$0xff]
        %567 = vset.pattern.permute.xlu0 0
        %568 = vperm.xlu0 %567, %v565
        %v569 = vpop.permute.xlu0 %568
        %v571 = vadd.f32 %v563, %v569
        %v572 = vadd.f32 %v564, %v569
        %v573 = vmax.f32 %v571, 0.0
        %v574 = vmax.f32 %v572, 0.0
        %575 = vrot.lane.b32.xlu0 %v573, 17
        %v576 = vpop.permute.xlu0 %575
        %577 = vrot.lane.b32.xlu0 %v574, 17
        %v578 = vpop.permute.xlu0 %577
        %v579 = vsel %vm375, %v576, %v578
        %v580 = vsel %vm375, %v578, %v576
        %v581 = vsel %vm380, %v580, 0.0
        %v582 = vsel %vm381, %v579, 0.0
        %583 = vrot.lane.b32.xlu0 %v573, 16
        %v584 = vpop.permute.xlu0 %583
        %585 = vrot.lane.b32.xlu0 %v574, 16
        %v586 = vpop.permute.xlu0 %585
        %v587 = vsel %vm388, %v584, %v586
        %v588 = vsel %vm388, %v586, %v584
        %v589 = vsel %vm393, %v588, 0.0
        %v590 = vsel %vm394, %v587, 0.0
        %591 = vrot.lane.b32.xlu0 %v573, 15
        %v592 = vpop.permute.xlu0 %591
        %593 = vrot.lane.b32.xlu0 %v574, 15
        %v594 = vpop.permute.xlu0 %593
        %v595 = vsel %vm401, %v592, %v594
        %v596 = vsel %vm401, %v594, %v592
        %v597 = vsel %vm406, %v596, 0.0
        %v598 = vsel %vm407, %v595, 0.0
        %599 = vrot.lane.b32.xlu0 %v573, 1
        %v600 = vpop.permute.xlu0 %599
        %601 = vrot.lane.b32.xlu0 %v574, 1
        %v602 = vpop.permute.xlu0 %601
        %v603 = vsel %vm414, %v600, %v602
        %v604 = vsel %vm414, %v602, %v600
        %v605 = vsel %vm419, %v604, 0.0
        %v606 = vsel %vm420, %v603, 0.0
        %v607 = vsel %vm425, %v573, 0.0
        %v608 = vsel %vm426, %v574, 0.0
        %609 = vrot.lane.b32.xlu0 %v573, 127
        %v610 = vpop.permute.xlu0 %609
        %611 = vrot.lane.b32.xlu0 %v574, 127
        %v612 = vpop.permute.xlu0 %611
        %v613 = vsel %vm433, %v610, %v612
        %v614 = vsel %vm433, %v612, %v610
        %v615 = vsel %vm438, %v613, 0.0
        %v616 = vsel %vm439, %v614, 0.0
        %617 = vrot.lane.b32.xlu0 %v573, 113
        %v618 = vpop.permute.xlu0 %617
        %619 = vrot.lane.b32.xlu0 %v574, 113
        %v620 = vpop.permute.xlu0 %619
        %v621 = vsel %vm446, %v618, %v620
        %v622 = vsel %vm446, %v620, %v618
        %v623 = vsel %vm451, %v621, 0.0
        %v624 = vsel %vm452, %v622, 0.0
        %625 = vrot.lane.b32.xlu0 %v573, 112
        %v626 = vpop.permute.xlu0 %625
        %627 = vrot.lane.b32.xlu0 %v574, 112
        %v628 = vpop.permute.xlu0 %627
        %v629 = vsel %vm459, %v626, %v628
        %v630 = vsel %vm459, %v628, %v626
        %v631 = vsel %vm464, %v629, 0.0
        %v632 = vsel %vm465, %v630, 0.0
        %633 = vrot.lane.b32.xlu0 %v573, 111
        %v634 = vpop.permute.xlu0 %633
        %635 = vrot.lane.b32.xlu0 %v574, 111
        %v636 = vpop.permute.xlu0 %635
        %v637 = vsel %vm472, %v634, %v636
        %v638 = vsel %vm472, %v636, %v634
        %v639 = vsel %vm477, %v637, 0.0
        %v640 = vsel %vm478, %v638, 0.0
        %v641 = vld [vmem:[%s4] sm:$0xff]
        %v643 = vsel %vm482, %v641, 0
        %645 = vmatprep.subr.mxu0 %v582
        %646 = vmatpush1.msra.mxu0 %v581
        %647 = vmatprep.subr.mxu0 %v590
        %648 = vmatpush1.msra.mxu0 %v589
        %649 = vmatprep.subr.mxu0 %v598
        %650 = vmatpush1.msra.mxu0 %v597
        %651 = vmatprep.subr.mxu0 %v606
        %652 = vmatpush1.msra.mxu0 %v605
        %653 = vmatprep.subr.mxu0 %v608
        %654 = vmatpush1.msra.mxu0 %v607
        %655 = vmatprep.subr.mxu0 %v616
        %656 = vmatpush1.msra.mxu0 %v615
        %657 = vmatprep.subr.mxu0 %v624
        %658 = vmatpush1.msra.mxu0 %v623
        %659 = vmatprep.subr.mxu0 %v632
        %660 = vmatpush1.msra.mxu0 %v631
        %661 = vmatprep.subr.mxu0 %v640
        %662 = vmatpush1.msra.mxu0 %v639
        %663 = vmatprep.subr.mxu0 0.0
        %664 = vmatpush1.msra.mxu0 0.0
        %665 = vmatprep.subr.mxu0 0.0
        %666 = vmatpush1.msra.mxu0 0.0
        %667 = vmatprep.subr.mxu0 0.0
        %668 = vmatpush1.msra.mxu0 0.0
        %669 = vmatprep.subr.mxu0 0.0
        %670 = vmatpush1.msra.mxu0 0.0
        %671 = vmatprep.subr.mxu0 0.0
        %672 = vmatpush1.msra.mxu0 0.0
        %673 = vmatprep.subr.mxu0 0.0
        %674 = vmatpush1.msra.mxu0 0.0
        %675 = vmatprep.subr.mxu0 0.0
        %676 = vmatpush1.msra.mxu0 0.0
        %677 = vmatprep.subr.mxu0 0.0
        %678 = vmatpush1.msra.mxu0 0.0
        %679 = vmatprep.subr.mxu0 0.0
        %680 = vmatpush1.msra.mxu0 0.0
        %681 = vmatprep.subr.mxu0 0.0
        %682 = vmatpush1.msra.mxu0 0.0
        %683 = vmatprep.subr.mxu0 0.0
        %684 = vmatpush1.msra.mxu0 0.0
        %685 = vmatprep.subr.mxu0 0.0
        %686 = vmatpush1.msra.mxu0 0.0
        %687 = vmatprep.subr.mxu0 0.0
        %688 = vmatpush1.msra.mxu0 0.0
        %689 = vmatprep.subr.mxu0 0.0
        %690 = vmatpush1.msra.mxu0 0.0
        %691 = vmatprep.subr.mxu0 0.0
        %692 = vmatpush1.msra.mxu0 0.0
        %693 = vmatprep.subr.mxu0 0.0
        %694 = vmatpush1.msra.mxu0 0.0
        %695 = vmatprep.subr.mxu0 0.0
        %696 = vmatpush1.msra.mxu0 0.0
        %697 = vmatprep.subr.mxu0 0.0
        %698 = vmatpush1.msra.mxu0 0.0
        %699 = vmatprep.subr.mxu0 0.0
        %700 = vmatpush1.msra.mxu0 0.0
        %701 = vmatprep.subr.mxu0 0.0
        %702 = vmatpush1.msra.mxu0 0.0
        %703 = vmatprep.subr.mxu0 0.0
        %704 = vmatpush1.msra.mxu0 0.0
        %705 = vmatprep.subr.mxu0 0.0
        %706 = vmatpush1.msra.mxu0 0.0
        %707 = vmatprep.subr.mxu0 0.0
        %708 = vmatpush1.msra.mxu0 0.0
        %709 = vmatprep.mubr.f32.mxu0 0.0
        %710 = vmatmul.mubr.f32.gmra.mrb[0].mxu0 %v643
        %v711 = vpop.f32.mrb[0].mxu0
        %v712 = vadd.f32 0.0, %v711
        %v713 = vpop.f32.mrb[0].mxu0
        %v714 = vadd.f32 0.0, %v713
        %715 = vdwg.mxu0
        %v716 = vld [vmem:[%s5] sm:$0xff]
        %718 = vset.pattern.permute.xlu0 0
        %719 = vperm.xlu0 %718, %v716
        %v720 = vpop.permute.xlu0 %719
        %v722 = vmul.f32 %v712, %v720
        %v723 = vmul.f32 %v714, %v720
        %v724 = vld [vmem:[%s6] sm:$0xff]
        %726 = vset.pattern.permute.xlu0 0
        %727 = vperm.xlu0 %726, %v724
        %v728 = vpop.permute.xlu0 %727
        %v730 = vadd.f32 %v722, %v728
        %v731 = vadd.f32 %v723, %v728
        %v732 = vadd.f32 %v730, %v290
        %v733 = vadd.f32 %v731, %v291
        %v734 = vmax.f32 %v732, 0.0
        %v735 = vmax.f32 %v733, 0.0
        %736 = vst [vmem:[%s284] sm:$0xff] %v734
        %737 = vst [vmem:[%s284 + $0x8] sm:$0xff] %v735
        %s738 = sand.u32 %s182, 1
        %s739 = scalar_lea.sflag [#allocation4], %s738
        %s740 = sand.u32 %s182, 1
        %s741 = smul.addr %s740, 16
        %s742 = scalar_lea.vmem [#allocation5], %s741
        // Predicated region
        $region53: #{tpu_custom_call.1} parent=47 // pred_check
          %p743 = pneg %p192
        $region54: #{tpu_custom_call.1} parent=47 // pred_check_branch
          %745 = sbr.rel (%p743) target = $region56
        $region55: #{tpu_custom_call.1} parent=47 // pred_region
          %s747 = ssub.s32 256, 256
          %748 = vsyncadd %s739, %s747
          %s749 = smul.addr %s22, 2
          %s750 = smul.addr %s749, 128
          %s751 = scalar_lea.hbm %s7, %s750
          %s753 = sshll.u32 %s742, 4
          %s754 = int_to_ptr.vmem [resolvable:$true] %s753
          %756 = dma.vmem_to_hbm [thread:$0]  %s754, 256, %s751, %s739
        $region56: #{tpu_custom_call.1} parent=47 // pred_fallthru
          _
      $region48: #{tpu_custom_call.1} parent=5 // pred_fallthru
        _
      %p757 = scmp.le.s32.totalorder 2, %s17
      // Predicated region
      $region57: #{tpu_custom_call.1} parent=5 // pred_check
        %p758 = pneg %p757
      $region58: #{tpu_custom_call.1} parent=5 // pred_check_branch
        %760 = sbr.rel (%p758) target = $region60
      $region59: #{tpu_custom_call.1} parent=5 // pred_region
        %s761 = ssub.s32 %s17, 2
        // Predicated region
        $region61: #{tpu_custom_call.1} parent=59 // pred_check
          %p762 = pneg %p198
        $region62: #{tpu_custom_call.1} parent=59 // pred_check_branch
          %764 = sbr.rel (%p762) target = $region64
        $region63: #{tpu_custom_call.1} parent=59 // pred_region
          %s765 = sand.u32 %s183, 1
          %s766 = scalar_lea.sflag [#allocation4], %s765
          %s767 = sand.u32 %s183, 1
          %s768 = smul.addr %s767, 16
          %s769 = scalar_lea.vmem [#allocation5], %s768
          %770 = dma.done %s766, 256
        $region64: #{tpu_custom_call.1} parent=59 // pred_fallthru
          _
      $region60: #{tpu_custom_call.1} parent=5 // pred_fallthru
        _
    $region6: #{tpu_custom_call.1} parent=1 // loop_footer
      %s21 = sadd.s32 1, %s17
    $region7: #{tpu_custom_call.1} parent=1 // loop_footer_branch
      %16 = sbr.rel target = $region3
    $region8: #{tpu_custom_call.1} parent=1 // loop_exit
      _
    %771 = vsyncpa [#allocation3], 1
    %s772 = scalar_lea.sflag [#allocation3], 1
    %773 = vsyncpa %s772, 1
    %774 = vsyncpa [#allocation4], 1
    %s775 = scalar_lea.sflag [#allocation4], 1
    %776 = vsyncpa %s775, 1

</llo_original>
